<compile_context>
chip_gen: v5e
topology: v5e:2x2
jax: 0.10.0
libtpu: 0.0.40
codegen_flags: <defaults>
</compile_context>

<pallas_src>
import jax
import jax.numpy as jnp
from jax import lax
from jax.experimental import pallas as pl
from jax.experimental.pallas import tpu as pltpu

# ---------------- sizes (consistent with the module) ----------------
OBS_DIM     = 48          # LSTM input size
HIDDEN      = 32          # LSTM hidden size  -> gate width 4*HIDDEN = 128
NUM_LAYERS  = 2           # LSTM layers
ACTOR_H0    = 64          # actor MLP hidden sizes
ACTOR_H1    = 64
NUM_ACTIONS = 12
LANES       = 128
TIME_BLOCK  = 8           # timesteps per grid step in the rollout kernel

# ---------------- packed parameter slab layout (rows of 128 lanes) ----------------
OFF_WIH0  = 0                       # (128,128): rows 0:48 = W_ih0 (obs at lanes 0:48)
OFF_WHH0  = OFF_WIH0 + LANES        # 128: (32,128) W_hh0
OFF_WIH1  = OFF_WHH0 + HIDDEN       # 160: (32,128) W_ih1
OFF_WHH1  = OFF_WIH1 + HIDDEN       # 192: (32,128) W_hh1
OFF_AW0   = OFF_WHH1 + HIDDEN       # 224: (32,128)  actor layer 0 (cols 0:64)
OFF_AW1   = OFF_AW0 + HIDDEN        # 256: (128,128) actor layer 1 (rows 0:64, cols 0:64)
OFF_AW2   = OFF_AW1 + LANES         # 384: (128,128) actor layer 2 (rows 0:64, cols 0:12)
OFF_B     = OFF_AW2 + LANES         # 512: bias rows (b0, b1, ab0, ab1, ab2)
SLAB_ROWS = OFF_B + 8               # 520 rows  (~260 KB, one DMA per call/rollout)


def _elu(x):
    # ELU(alpha=1).  exp argument is clamped so the unselected branch can never
    # produce +inf (safe under autodiff); identical to exp(x)-1 for x <= 0.
    return jnp.where(x > 0, x, jnp.exp(jnp.minimum(x, 0.0)) - 1.0)


def _policy_core(g0x, h0p, h1p, c0p, c1p, slab_ref):
    """One LSTM(2-layer, PyTorch i,f,g,o gate order) + actor-MLP step.

    g0x         : (1,128) precomputed  x @ W_ih0 + b0  (off the recurrent chain)
    h0p,h1p     : (1,HIDDEN) previous hidden states
    c0p,c1p     : (1,HIDDEN) previous cell states
    Returns (action_row (1,128), h0, c0, h1, c1) with h/c as (1,HIDDEN).
    """
    H = HIDDEN

    # ----- LSTM layer 0: only the K=32 recurrent dot is on the serial chain -----
    g0 = g0x + jnp.dot(h0p, slab_ref[OFF_WHH0:OFF_WHH0 + H, :],
                       preferred_element_type=jnp.float32)
    s0 = jax.nn.sigmoid(g0)                               # full-width sigmoid (i,f,o)
    t0 = jnp.tanh(g0)                                     # full-width tanh   (g)
    c0 = s0[:, H:2 * H] * c0p + s0[:, 0:H] * t0[:, 2 * H:3 * H]
    h0 = s0[:, 3 * H:4 * H] * jnp.tanh(c0)

    # ----- LSTM layer 1: two K=32 dots; the W_hh1 dot only needs loop-carried
    #       h1p, so the scheduler can overlap it with layer-0 compute. -----
    g1 = (jnp.dot(h1p, slab_ref[OFF_WHH1:OFF_WHH1 + H, :],
                  preferred_element_type=jnp.float32)
          + jnp.dot(h0, slab_ref[OFF_WIH1:OFF_WIH1 + H, :],
                    preferred_element_type=jnp.float32)
          + slab_ref[OFF_B + 1:OFF_B + 2, :])
    s1 = jax.nn.sigmoid(g1)
    t1 = jnp.tanh(g1)
    c1 = s1[:, H:2 * H] * c1p + s1[:, 0:H] * t1[:, 2 * H:3 * H]
    h1 = s1[:, 3 * H:4 * H] * jnp.tanh(c1)

    # ----- actor MLP: Linear -> ELU -> Linear -> ELU -> Linear -----
    # First dot is K=32 (h1 is already (1,32)); the next two feed the FULL
    # 128-lane activation vreg into 128-row (zero-padded) weight blocks, so no
    # lane slicing sits on the chain.  Lanes 64:128 of `a` are exactly zero
    # (zero weight cols + zero bias, ELU(0)=0), and the padded weight rows are
    # zero anyway, so correctness never depends on the padding.
    a = _elu(jnp.dot(h1, slab_ref[OFF_AW0:OFF_AW0 + H, :],
                     preferred_element_type=jnp.float32)
             + slab_ref[OFF_B + 2:OFF_B + 3, :])
    a = _elu(jnp.dot(a, slab_ref[OFF_AW1:OFF_AW1 + LANES, :],
                     preferred_element_type=jnp.float32)
             + slab_ref[OFF_B + 3:OFF_B + 4, :])
    a = (jnp.dot(a, slab_ref[OFF_AW2:OFF_AW2 + LANES, :],
                 preferred_element_type=jnp.float32)
         + slab_ref[OFF_B + 4:OFF_B + 5, :])
    return a, h0, c0, h1, c1


# ---------------- single-step kernel (module forward) ----------------
def policy_step_kernel(x_ref, st_ref, slab_ref, act_ref, st_out_ref):
    g0x = (jnp.dot(x_ref[...], slab_ref[OFF_WIH0:OFF_WIH0 + LANES, :],
                   preferred_element_type=jnp.float32)
           + slab_ref[OFF_B + 0:OFF_B + 1, :])

    h0p = st_ref[0:1, :][:, 0:HIDDEN]
    h1p = st_ref[1:2, :][:, 0:HIDDEN]
    c0p = st_ref[2:3, :][:, 0:HIDDEN]
    c1p = st_ref[3:4, :][:, 0:HIDDEN]

    a, h0, c0, h1, c1 = _policy_core(g0x, h0p, h1p, c0p, c1p, slab_ref)

    act_ref[...] = a                                      # lane-dense (1,128) store
    st_out_ref[...] = st_ref[...]                         # keep padding rows/lanes
    st_out_ref[0:1, 0:HIDDEN] = h0
    st_out_ref[1:2, 0:HIDDEN] = h1
    st_out_ref[2:3, 0:HIDDEN] = c0
    st_out_ref[3:4, 0:HIDDEN] = c1


# ---------------- rollout kernel: TIME_BLOCK steps per grid iteration ----------------
def policy_rollout_kernel(x_ref, st_ref, slab_ref, act_ref, st_out_ref, gx_ref):
    g = pl.program_id(0)

    @pl.when(g == 0)
    def _init():
        st_out_ref[...] = st_ref[...]       # state lives in the resident output block

    # Batched layer-0 input projection for all TIME_BLOCK steps: one MXU pass,
    # 8 sublanes utilized, off the recurrent chain.
    gx_ref[...] = (jnp.dot(x_ref[...], slab_ref[OFF_WIH0:OFF_WIH0 + LANES, :],
                           preferred_element_type=jnp.float32)
                   + slab_ref[OFF_B + 0:OFF_B + 1, :])

    # Load the carried recurrent state once per grid step (written back below).
    h0 = st_out_ref[0:1, :][:, 0:HIDDEN]
    h1 = st_out_ref[1:2, :][:, 0:HIDDEN]
    c0 = st_out_ref[2:3, :][:, 0:HIDDEN]
    c1 = st_out_ref[3:4, :][:, 0:HIDDEN]

    def body(t, carry):
        h0, h1, c0, c1 = carry
        g0x = gx_ref[pl.ds(t, 1), :]                      # (1,128) precomputed row
        a, h0, c0, h1, c1 = _policy_core(g0x, h0, h1, c0, c1, slab_ref)
        act_ref[pl.ds(t, 1), :] = a                       # dense (1,128) row store
        return (h0, h1, c0, c1)

    h0, h1, c0, c1 = lax.fori_loop(0, TIME_BLOCK, body, (h0, h1, c0, c1),
                                   unroll=True)

    # Write the carry back once per grid step (4 tiny stores per 8 timesteps);
    # the block index is constant so HBM writeback happens once, at the end.
    st_out_ref[0:1, 0:HIDDEN] = h0
    st_out_ref[1:2, 0:HIDDEN] = h1
    st_out_ref[2:3, 0:HIDDEN] = c0
    st_out_ref[3:4, 0:HIDDEN] = c1


# ---------------- host-side packing helpers ----------------
_VMEM = pl.BlockSpec(memory_space=pltpu.MemorySpace.VMEM)


def _pack_obs(x):
    """(..., OBS_DIM) -> (..., 128) with obs at lanes [0, OBS_DIM)."""
    xp = jnp.zeros(x.shape[:-1] + (LANES,), jnp.float32)
    return xp.at[..., 0:OBS_DIM].set(x)


def _pack_state(h_state, c_state):
    """(2,32)+(2,32) -> one (8,128) tile: rows 0,1 = h ; rows 2,3 = c (lanes 0:32)."""
    st = jnp.zeros((8, LANES), jnp.float32)
    st = st.at[0:2, 0:HIDDEN].set(h_state)
    st = st.at[2:4, 0:HIDDEN].set(c_state)
    return st


def pack_params(params):
    """Pack all 12 parameter tensors (pre-transposed to (in,out)) into one slab."""
    (wih0, whh0, b0, wih1, whh1, b1, aw0, ab0, aw1, ab1, aw2, ab2) = params
    slab = jnp.zeros((SLAB_ROWS, LANES), jnp.float32)
    slab = slab.at[OFF_WIH0:OFF_WIH0 + OBS_DIM, :].set(wih0)   # obs at lanes 0:48
    slab = slab.at[OFF_WHH0:OFF_WHH0 + HIDDEN, :].set(whh0)
    slab = slab.at[OFF_WIH1:OFF_WIH1 + HIDDEN, :].set(wih1)
    slab = slab.at[OFF_WHH1:OFF_WHH1 + HIDDEN, :].set(whh1)
    # actor MLP (lane-padded to 128 output lanes; AW1/AW2 row-padded to K=128)
    slab = slab.at[OFF_AW0:OFF_AW0 + HIDDEN, :ACTOR_H0].set(aw0)
    slab = slab.at[OFF_AW1:OFF_AW1 + ACTOR_H0, :ACTOR_H1].set(aw1)
    slab = slab.at[OFF_AW2:OFF_AW2 + ACTOR_H1, :NUM_ACTIONS].set(aw2)
    # biases
    slab = slab.at[OFF_B + 0, :].set(b0[0])
    slab = slab.at[OFF_B + 1, :].set(b1[0])
    slab = slab.at[OFF_B + 2, :ACTOR_H0].set(ab0[0])
    slab = slab.at[OFF_B + 3, :ACTOR_H1].set(ab1[0])
    slab = slab.at[OFF_B + 4, :NUM_ACTIONS].set(ab2[0])
    return slab


# ---------------- wrappers ----------------
@jax.jit
def policy_forward(x, h_state, c_state, slab):
    """x: (1, OBS_DIM) f32. h_state/c_state: (NUM_LAYERS, HIDDEN) f32.
    Returns (action (1, NUM_ACTIONS), new_h, new_c).
    For repeated stepping prefer policy_rollout (weights DMA'd once)."""
    x_pad = _pack_obs(x)
    st = _pack_state(h_state, c_state)
    act_pad, st_new = pl.pallas_call(
        policy_step_kernel,
        out_shape=(jax.ShapeDtypeStruct((1, LANES), jnp.float32),
                   jax.ShapeDtypeStruct((8, LANES), jnp.float32)),
        in_specs=[_VMEM, _VMEM, _VMEM],
        out_specs=(_VMEM, _VMEM),
        input_output_aliases={1: 1},          # recurrent state updated in place
    )(x_pad, st, slab)
    return (act_pad[:, :NUM_ACTIONS],
            st_new[0:2, 0:HIDDEN],
            st_new[2:4, 0:HIDDEN])


@jax.jit
def policy_rollout(xs, h_state, c_state, slab):
    """xs: (T, OBS_DIM) with T % TIME_BLOCK == 0.  Runs T policy steps with the
    weight slab DMA'd once, TIME_BLOCK steps per grid iteration, and the
    recurrent state carried in registers / the resident output block."""
    T = xs.shape[0]
    assert T % TIME_BLOCK == 0, "pad the rollout length to a multiple of TIME_BLOCK"
    xs_rows = _pack_obs(xs)                                # (T,128) dense rows
    st = _pack_state(h_state, c_state)
    acts, st_new = pl.pallas_call(
        policy_rollout_kernel,
        out_shape=(jax.ShapeDtypeStruct((T, LANES), jnp.float32),
                   jax.ShapeDtypeStruct((8, LANES), jnp.float32)),
        grid=(T // TIME_BLOCK,),
        in_specs=[pl.BlockSpec((TIME_BLOCK, LANES), lambda g: (g, 0)),
                  pl.BlockSpec((8, LANES), lambda g: (0, 0)),
                  pl.BlockSpec((SLAB_ROWS, LANES), lambda g: (0, 0))],
        out_specs=(pl.BlockSpec((TIME_BLOCK, LANES), lambda g: (g, 0)),
                   pl.BlockSpec((8, LANES), lambda g: (0, 0))),
        scratch_shapes=[pltpu.VMEM((TIME_BLOCK, LANES), jnp.float32)],  # gx buffer
        input_output_aliases={1: 1},
        compiler_params=pltpu.CompilerParams(dimension_semantics=("arbitrary",)),
    )(xs_rows, st, slab)
    return (acts[:, :NUM_ACTIONS],
            st_new[0:2, 0:HIDDEN],
            st_new[2:4, 0:HIDDEN])


# ---------------- synthetic params + pure-JAX reference ----------------
def init_params(key):
    """Deterministic synthetic parameters (PyTorch shapes, pre-transposed to (in,out))."""
    ks = jax.random.split(key, 16)
    s = 0.1

    def mat(k, in_dim, out_dim):
        return (s * jax.random.normal(k, (in_dim, out_dim))).astype(jnp.float32)

    wih0 = mat(ks[0], OBS_DIM, 4 * HIDDEN)
    whh0 = mat(ks[1], HIDDEN, 4 * HIDDEN)
    b0 = (s * jax.random.normal(ks[2], (1, 4 * HIDDEN))).astype(jnp.float32)  # b_ih + b_hh
    wih1 = mat(ks[3], HIDDEN, 4 * HIDDEN)
    whh1 = mat(ks[4], HIDDEN, 4 * HIDDEN)
    b1 = (s * jax.random.normal(ks[5], (1, 4 * HIDDEN))).astype(jnp.float32)
    aw0 = mat(ks[6], HIDDEN, ACTOR_H0)
    ab0 = (s * jax.random.normal(ks[7], (1, ACTOR_H0))).astype(jnp.float32)
    aw1 = mat(ks[8], ACTOR_H0, ACTOR_H1)
    ab1 = (s * jax.random.normal(ks[9], (1, ACTOR_H1))).astype(jnp.float32)
    aw2 = mat(ks[10], ACTOR_H1, NUM_ACTIONS)
    ab2 = (s * jax.random.normal(ks[11], (1, NUM_ACTIONS))).astype(jnp.float32)
    return (wih0, whh0, b0, wih1, whh1, b1, aw0, ab0, aw1, ab1, aw2, ab2)


def reference_forward(x, h_state, c_state, params):
    """Pure-JAX reference (mirrors torch.nn.LSTM + actor MLP, gate order i,f,g,o)."""
    (wih0, whh0, b0, wih1, whh1, b1,
     aw0, ab0, aw1, ab1, aw2, ab2) = params

    def step(x_row, h_prev, c_prev, w_ih, w_hh, b):
        g = x_row @ w_ih + h_prev @ w_hh + b
        H = HIDDEN
        i = jax.nn.sigmoid(g[:, 0 * H:1 * H])
        f = jax.nn.sigmoid(g[:, 1 * H:2 * H])
        gg = jnp.tanh(g[:, 2 * H:3 * H])
        o = jax.nn.sigmoid(g[:, 3 * H:4 * H])
        c = f * c_prev + i * gg
        h = o * jnp.tanh(c)
        return h, c

    h0, c0 = step(x, h_state[0:1], c_state[0:1], wih0, whh0, b0)
    h1, c1 = step(h0, h_state[1:2], c_state[1:2], wih1, whh1, b1)
    elu = lambda v: jnp.where(v > 0, v, jnp.exp(v) - 1.0)
    a = elu(h1 @ aw0 + ab0)
    a = elu(a @ aw1 + ab1)
    a = a @ aw2 + ab2
    return a, jnp.concatenate([h0, h1], 0), jnp.concatenate([c0, c1], 0)


if __name__ == "__main__":
    key = jax.random.PRNGKey(0)
    kx, kp, kr = jax.random.split(key, 3)

    params = init_params(kp)
    slab = pack_params(params)

    x = jax.random.normal(kx, (1, OBS_DIM), dtype=jnp.float32)
    h_state = jnp.zeros((NUM_LAYERS, HIDDEN), jnp.float32)   # register_buffer equivalents
    c_state = jnp.zeros((NUM_LAYERS, HIDDEN), jnp.float32)

    # ---- single step (module forward) ----
    action, new_h, new_c = policy_forward(x, h_state, c_state, slab)
    jax.block_until_ready((action, new_h, new_c))
    ref_a, ref_h, ref_c = reference_forward(x, h_state, c_state, params)
    assert jnp.allclose(action, ref_a, atol=1e-5, rtol=1e-5)
    assert jnp.allclose(new_h, ref_h, atol=1e-5, rtol=1e-5)
    assert jnp.allclose(new_c, ref_c, atol=1e-5, rtol=1e-5)

    # ---- second step feeding back the updated recurrent state ----
    action2, new_h2, new_c2 = policy_forward(x, new_h, new_c, slab)
    jax.block_until_ready((action2, new_h2, new_c2))
    ref_a2, ref_h2, ref_c2 = reference_forward(x, ref_h, ref_c, params)
    assert jnp.allclose(action2, ref_a2, atol=1e-5, rtol=1e-5)
    assert jnp.allclose(new_h2, ref_h2, atol=1e-5, rtol=1e-5)
    assert jnp.allclose(new_c2, ref_c2, atol=1e-5, rtol=1e-5)

    # ---- multi-step rollout: 2 grid blocks x TIME_BLOCK steps ----
    T = 2 * TIME_BLOCK
    xs = jax.random.normal(kr, (T, OBS_DIM), dtype=jnp.float32)
    acts, hT, cT = policy_rollout(xs, h_state, c_state, slab)
    jax.block_until_ready((acts, hT, cT))
    rh, rc = h_state, c_state
    ref_acts = []
    for t in range(T):
        ra, rh, rc = reference_forward(xs[t:t + 1], rh, rc, params)
        ref_acts.append(ra)
    ref_acts = jnp.concatenate(ref_acts, axis=0)
    assert jnp.allclose(acts, ref_acts, atol=1e-4, rtol=1e-4)
    assert jnp.allclose(hT, rh, atol=1e-4, rtol=1e-4)
    assert jnp.allclose(cT, rc, atol=1e-4, rtol=1e-4)

    print("KERNEL_OK")
</pallas_src>

<mosaic_0001>
module attributes {stable_mosaic.version = 11 : i64} {
  func.func @policy_step_kernel(%arg0: memref<1x128xf32, #tpu.memory_space<vmem>>, %arg1: memref<8x128xf32, #tpu.memory_space<vmem>>, %arg2: memref<520x128xf32, #tpu.memory_space<vmem>>, %arg3: memref<1x128xf32, #tpu.memory_space<vmem>>, %arg4: memref<8x128xf32, #tpu.memory_space<vmem>>) attributes {dimension_semantics = [], scalar_prefetch = 0 : i64, scratch_operands = 0 : i64, tpu.core_type = #tpu.core_type<tc>} {
    %c0 = arith.constant 0 : index
    %c0_0 = arith.constant 0 : index
    %0 = vector.load %arg0[%c0, %c0_0] : memref<1x128xf32, #tpu.memory_space<vmem>>, vector<1x128xf32>
    %c0_1 = arith.constant 0 : index
    %c0_2 = arith.constant 0 : index
    %1 = vector.load %arg2[%c0_1, %c0_2] : memref<520x128xf32, #tpu.memory_space<vmem>>, vector<128x128xf32>
    %cst = arith.constant dense<0.000000e+00> : vector<1x128xf32>
    %2 = tpu.matmul %0, %1, %cst {dimension_numbers = #tpu.dot_dimension_numbers<[1], [0], [0], [1], [0, 0, 1, 1], [], []>} : vector<1x128xf32>, vector<128x128xf32>, vector<1x128xf32> -> vector<1x128xf32>
    %c512 = arith.constant 512 : index
    %c0_3 = arith.constant 0 : index
    %3 = vector.load %arg2[%c512, %c0_3] : memref<520x128xf32, #tpu.memory_space<vmem>>, vector<1x128xf32>
    %4 = arith.addf %2, %3 : vector<1x128xf32>
    %c0_4 = arith.constant 0 : index
    %c0_5 = arith.constant 0 : index
    %5 = vector.load %arg1[%c0_4, %c0_5] : memref<8x128xf32, #tpu.memory_space<vmem>>, vector<1x128xf32>
    %6 = vector.extract_strided_slice %5 {offsets = [0, 0], sizes = [1, 32], strides = [1, 1]} : vector<1x128xf32> to vector<1x32xf32>
    %c1 = arith.constant 1 : index
    %c0_6 = arith.constant 0 : index
    %7 = vector.load %arg1[%c1, %c0_6] : memref<8x128xf32, #tpu.memory_space<vmem>>, vector<1x128xf32>
    %8 = vector.extract_strided_slice %7 {offsets = [0, 0], sizes = [1, 32], strides = [1, 1]} : vector<1x128xf32> to vector<1x32xf32>
    %c2 = arith.constant 2 : index
    %c0_7 = arith.constant 0 : index
    %9 = vector.load %arg1[%c2, %c0_7] : memref<8x128xf32, #tpu.memory_space<vmem>>, vector<1x128xf32>
    %10 = vector.extract_strided_slice %9 {offsets = [0, 0], sizes = [1, 32], strides = [1, 1]} : vector<1x128xf32> to vector<1x32xf32>
    %c3 = arith.constant 3 : index
    %c0_8 = arith.constant 0 : index
    %11 = vector.load %arg1[%c3, %c0_8] : memref<8x128xf32, #tpu.memory_space<vmem>>, vector<1x128xf32>
    %12 = vector.extract_strided_slice %11 {offsets = [0, 0], sizes = [1, 32], strides = [1, 1]} : vector<1x128xf32> to vector<1x32xf32>
    %c128 = arith.constant 128 : index
    %c0_9 = arith.constant 0 : index
    %13 = vector.load %arg2[%c128, %c0_9] : memref<520x128xf32, #tpu.memory_space<vmem>>, vector<32x128xf32>
    %cst_10 = arith.constant dense<0.000000e+00> : vector<1x128xf32>
    %14 = tpu.matmul %6, %13, %cst_10 {dimension_numbers = #tpu.dot_dimension_numbers<[1], [0], [0], [1], [0, 0, 1, 1], [], []>} : vector<1x32xf32>, vector<32x128xf32>, vector<1x128xf32> -> vector<1x128xf32>
    %15 = arith.addf %4, %14 : vector<1x128xf32>
    %16 = arith.negf %15 : vector<1x128xf32>
    %17 = math.exp %16 : vector<1x128xf32>
    %cst_11 = arith.constant 1.000000e+00 : f32
    %18 = vector.broadcast %cst_11 : f32 to vector<1x128xf32>
    %19 = arith.addf %18, %17 : vector<1x128xf32>
    %20 = arith.divf %18, %19 : vector<1x128xf32>
    %21 = math.tanh %15 : vector<1x128xf32>
    %22 = vector.extract_strided_slice %20 {offsets = [0, 32], sizes = [1, 32], strides = [1, 1]} : vector<1x128xf32> to vector<1x32xf32>
    %23 = arith.mulf %22, %10 : vector<1x32xf32>
    %24 = vector.extract_strided_slice %20 {offsets = [0, 0], sizes = [1, 32], strides = [1, 1]} : vector<1x128xf32> to vector<1x32xf32>
    %25 = vector.extract_strided_slice %21 {offsets = [0, 64], sizes = [1, 32], strides = [1, 1]} : vector<1x128xf32> to vector<1x32xf32>
    %26 = arith.mulf %24, %25 : vector<1x32xf32>
    %27 = arith.addf %23, %26 : vector<1x32xf32>
    %28 = vector.extract_strided_slice %20 {offsets = [0, 96], sizes = [1, 32], strides = [1, 1]} : vector<1x128xf32> to vector<1x32xf32>
    %29 = math.tanh %27 : vector<1x32xf32>
    %30 = arith.mulf %28, %29 : vector<1x32xf32>
    %c192 = arith.constant 192 : index
    %c0_12 = arith.constant 0 : index
    %31 = vector.load %arg2[%c192, %c0_12] : memref<520x128xf32, #tpu.memory_space<vmem>>, vector<32x128xf32>
    %cst_13 = arith.constant dense<0.000000e+00> : vector<1x128xf32>
    %32 = tpu.matmul %8, %31, %cst_13 {dimension_numbers = #tpu.dot_dimension_numbers<[1], [0], [0], [1], [0, 0, 1, 1], [], []>} : vector<1x32xf32>, vector<32x128xf32>, vector<1x128xf32> -> vector<1x128xf32>
    %c160 = arith.constant 160 : index
    %c0_14 = arith.constant 0 : index
    %33 = vector.load %arg2[%c160, %c0_14] : memref<520x128xf32, #tpu.memory_space<vmem>>, vector<32x128xf32>
    %cst_15 = arith.constant dense<0.000000e+00> : vector<1x128xf32>
    %34 = tpu.matmul %30, %33, %cst_15 {dimension_numbers = #tpu.dot_dimension_numbers<[1], [0], [0], [1], [0, 0, 1, 1], [], []>} : vector<1x32xf32>, vector<32x128xf32>, vector<1x128xf32> -> vector<1x128xf32>
    %35 = arith.addf %32, %34 : vector<1x128xf32>
    %c513 = arith.constant 513 : index
    %c0_16 = arith.constant 0 : index
    %36 = vector.load %arg2[%c513, %c0_16] : memref<520x128xf32, #tpu.memory_space<vmem>>, vector<1x128xf32>
    %37 = arith.addf %35, %36 : vector<1x128xf32>
    %38 = arith.negf %37 : vector<1x128xf32>
    %39 = math.exp %38 : vector<1x128xf32>
    %cst_17 = arith.constant 1.000000e+00 : f32
    %40 = vector.broadcast %cst_17 : f32 to vector<1x128xf32>
    %41 = arith.addf %40, %39 : vector<1x128xf32>
    %42 = arith.divf %40, %41 : vector<1x128xf32>
    %43 = math.tanh %37 : vector<1x128xf32>
    %44 = vector.extract_strided_slice %42 {offsets = [0, 32], sizes = [1, 32], strides = [1, 1]} : vector<1x128xf32> to vector<1x32xf32>
    %45 = arith.mulf %44, %12 : vector<1x32xf32>
    %46 = vector.extract_strided_slice %42 {offsets = [0, 0], sizes = [1, 32], strides = [1, 1]} : vector<1x128xf32> to vector<1x32xf32>
    %47 = vector.extract_strided_slice %43 {offsets = [0, 64], sizes = [1, 32], strides = [1, 1]} : vector<1x128xf32> to vector<1x32xf32>
    %48 = arith.mulf %46, %47 : vector<1x32xf32>
    %49 = arith.addf %45, %48 : vector<1x32xf32>
    %50 = vector.extract_strided_slice %42 {offsets = [0, 96], sizes = [1, 32], strides = [1, 1]} : vector<1x128xf32> to vector<1x32xf32>
    %51 = math.tanh %49 : vector<1x32xf32>
    %52 = arith.mulf %50, %51 : vector<1x32xf32>
    %c224 = arith.constant 224 : index
    %c0_18 = arith.constant 0 : index
    %53 = vector.load %arg2[%c224, %c0_18] : memref<520x128xf32, #tpu.memory_space<vmem>>, vector<32x128xf32>
    %cst_19 = arith.constant dense<0.000000e+00> : vector<1x128xf32>
    %54 = tpu.matmul %52, %53, %cst_19 {dimension_numbers = #tpu.dot_dimension_numbers<[1], [0], [0], [1], [0, 0, 1, 1], [], []>} : vector<1x32xf32>, vector<32x128xf32>, vector<1x128xf32> -> vector<1x128xf32>
    %c514 = arith.constant 514 : index
    %c0_20 = arith.constant 0 : index
    %55 = vector.load %arg2[%c514, %c0_20] : memref<520x128xf32, #tpu.memory_space<vmem>>, vector<1x128xf32>
    %56 = arith.addf %54, %55 : vector<1x128xf32>
    %cst_21 = arith.constant 0.000000e+00 : f32
    %57 = vector.broadcast %cst_21 : f32 to vector<1x128xf32>
    %58 = arith.cmpf ogt, %56, %57 : vector<1x128xf32>
    %cst_22 = arith.constant 0.000000e+00 : f32
    %59 = vector.broadcast %cst_22 : f32 to vector<1x128xf32>
    %60 = arith.minimumf %56, %59 : vector<1x128xf32>
    %61 = math.exp %60 : vector<1x128xf32>
    %cst_23 = arith.constant 1.000000e+00 : f32
    %62 = vector.broadcast %cst_23 : f32 to vector<1x128xf32>
    %63 = arith.subf %61, %62 : vector<1x128xf32>
    %64 = arith.select %58, %56, %63 : vector<1x128xi1>, vector<1x128xf32>
    %c256 = arith.constant 256 : index
    %c0_24 = arith.constant 0 : index
    %65 = vector.load %arg2[%c256, %c0_24] : memref<520x128xf32, #tpu.memory_space<vmem>>, vector<128x128xf32>
    %cst_25 = arith.constant dense<0.000000e+00> : vector<1x128xf32>
    %66 = tpu.matmul %64, %65, %cst_25 {dimension_numbers = #tpu.dot_dimension_numbers<[1], [0], [0], [1], [0, 0, 1, 1], [], []>} : vector<1x128xf32>, vector<128x128xf32>, vector<1x128xf32> -> vector<1x128xf32>
    %c515 = arith.constant 515 : index
    %c0_26 = arith.constant 0 : index
    %67 = vector.load %arg2[%c515, %c0_26] : memref<520x128xf32, #tpu.memory_space<vmem>>, vector<1x128xf32>
    %68 = arith.addf %66, %67 : vector<1x128xf32>
    %cst_27 = arith.constant 0.000000e+00 : f32
    %69 = vector.broadcast %cst_27 : f32 to vector<1x128xf32>
    %70 = arith.cmpf ogt, %68, %69 : vector<1x128xf32>
    %cst_28 = arith.constant 0.000000e+00 : f32
    %71 = vector.broadcast %cst_28 : f32 to vector<1x128xf32>
    %72 = arith.minimumf %68, %71 : vector<1x128xf32>
    %73 = math.exp %72 : vector<1x128xf32>
    %cst_29 = arith.constant 1.000000e+00 : f32
    %74 = vector.broadcast %cst_29 : f32 to vector<1x128xf32>
    %75 = arith.subf %73, %74 : vector<1x128xf32>
    %76 = arith.select %70, %68, %75 : vector<1x128xi1>, vector<1x128xf32>
    %c384 = arith.constant 384 : index
    %c0_30 = arith.constant 0 : index
    %77 = vector.load %arg2[%c384, %c0_30] : memref<520x128xf32, #tpu.memory_space<vmem>>, vector<128x128xf32>
    %cst_31 = arith.constant dense<0.000000e+00> : vector<1x128xf32>
    %78 = tpu.matmul %76, %77, %cst_31 {dimension_numbers = #tpu.dot_dimension_numbers<[1], [0], [0], [1], [0, 0, 1, 1], [], []>} : vector<1x128xf32>, vector<128x128xf32>, vector<1x128xf32> -> vector<1x128xf32>
    %c516 = arith.constant 516 : index
    %c0_32 = arith.constant 0 : index
    %79 = vector.load %arg2[%c516, %c0_32] : memref<520x128xf32, #tpu.memory_space<vmem>>, vector<1x128xf32>
    %80 = arith.addf %78, %79 : vector<1x128xf32>
    %c0_33 = arith.constant 0 : index
    %c0_34 = arith.constant 0 : index
    %81 = vector.load %arg3[%c0_33, %c0_34] : memref<1x128xf32, #tpu.memory_space<vmem>>, vector<1x128xf32>
    tpu.vector_store %arg3[%c0_33, %c0_34], %80 {strides = array<i32>} : memref<1x128xf32, #tpu.memory_space<vmem>>, vector<1x128xf32>,
    %c0_35 = arith.constant 0 : index
    %c0_36 = arith.constant 0 : index
    %82 = vector.load %arg1[%c0_35, %c0_36] : memref<8x128xf32, #tpu.memory_space<vmem>>, vector<8x128xf32>
    %c0_37 = arith.constant 0 : index
    %c0_38 = arith.constant 0 : index
    %83 = vector.load %arg4[%c0_37, %c0_38] : memref<8x128xf32, #tpu.memory_space<vmem>>, vector<8x128xf32>
    tpu.vector_store %arg4[%c0_37, %c0_38], %82 {strides = array<i32>} : memref<8x128xf32, #tpu.memory_space<vmem>>, vector<8x128xf32>,
    %c0_39 = arith.constant 0 : index
    %c0_40 = arith.constant 0 : index
    %84 = vector.load %arg4[%c0_39, %c0_40] : memref<8x128xf32, #tpu.memory_space<vmem>>, vector<1x32xf32>
    tpu.vector_store %arg4[%c0_39, %c0_40], %30 {strides = array<i32>} : memref<8x128xf32, #tpu.memory_space<vmem>>, vector<1x32xf32>,
    %c1_41 = arith.constant 1 : index
    %c0_42 = arith.constant 0 : index
    %85 = vector.load %arg4[%c1_41, %c0_42] : memref<8x128xf32, #tpu.memory_space<vmem>>, vector<1x32xf32>
    tpu.vector_store %arg4[%c1_41, %c0_42], %52 {strides = array<i32>} : memref<8x128xf32, #tpu.memory_space<vmem>>, vector<1x32xf32>,
    %c2_43 = arith.constant 2 : index
    %c0_44 = arith.constant 0 : index
    %86 = vector.load %arg4[%c2_43, %c0_44] : memref<8x128xf32, #tpu.memory_space<vmem>>, vector<1x32xf32>
    tpu.vector_store %arg4[%c2_43, %c0_44], %27 {strides = array<i32>} : memref<8x128xf32, #tpu.memory_space<vmem>>, vector<1x32xf32>,
    %c3_45 = arith.constant 3 : index
    %c0_46 = arith.constant 0 : index
    %87 = vector.load %arg4[%c3_45, %c0_46] : memref<8x128xf32, #tpu.memory_space<vmem>>, vector<1x32xf32>
    tpu.vector_store %arg4[%c3_45, %c0_46], %49 {strides = array<i32>} : memref<8x128xf32, #tpu.memory_space<vmem>>, vector<1x32xf32>,
    return
  }
}

</mosaic_0001>

<llo_original>
// kernel: policy_forward.1
$region0: #{policy_forward.1}
  #allocation0 [shape = 'u32[]', space=smem, size = 0x4, offset = 0x4, fixed_abs, tag = 'smem constant byte address 0x4 - core index']
  #allocation1 [shape = 'u32[72,128]{1,0:T(1,128)}', space=vmem, size = 0x9000, scoped, tag = 'internal scratch']
  %s0 = inlined_call_operand.vmem [shape: f32[1,128], index: 0, kind: input, shape index: {}]
  %s1 = inlined_call_operand.vmem [shape: f32[8,128], index: 1, kind: input, shape index: {}, may-alias: {1,4}]
  %s2 = inlined_call_operand.hbm [shape: f32[520,128], index: 2, kind: input, shape index: {}]
  %s3 = inlined_call_operand.hbm [shape: f32[1,128], index: 3, kind: output, shape index: {0}]
  %s4 = inlined_call_operand.vmem [shape: f32[8,128], index: 4, kind: output, shape index: {1}, may-alias: {1,4}]
  %5 = xla_tuple %s3, %s4
  %s6 = sld [smem:[#allocation0]]
  $region34: #{policy_forward.1} parent=0
    _
  %s8 = ssub.s32 1, %s6
  %s9 = scalar_select 0, %s8, %s6
  $region1: #{policy_forward.1} parent=0
    #allocation2 [shape = 'u8[266240]{0}', space=vmem, size = 0x41000, scoped, tag = 'input window, operand 2, single buffered']
    #allocation3 [shape = 's32[1]{0}', space=sflag, size = 0x4, scoped, tag = 'scoped memory for policy_forward.1']
    #allocation4 [shape = 's32[1]{0}', space=sflag, size = 0x4, scoped, tag = 'scoped memory for policy_forward.1']
    #allocation5 [shape = 'u8[512]{0}', space=vmem, size = 0x400, scoped, tag = 'output window, operand 0, single buffered']
    %10 = vsyncpa [#allocation3], 0
    %11 = vsyncpa [#allocation4], 0
    // Predicated region
    $region2: #{policy_forward.1} parent=1 // pred_check
      _
    $region3: #{policy_forward.1} parent=1 // pred_check_branch
      %13 = sbr.rel (0) target = $region5
    $region4: #{policy_forward.1} parent=1 // pred_region
      _
    $region5: #{policy_forward.1} parent=1 // pred_fallthru
      _
    // Predicated region
    $region6: #{policy_forward.1} parent=1 // pred_check
      _
    $region7: #{policy_forward.1} parent=1 // pred_check_branch
      %15 = sbr.rel (0) target = $region9
    $region8: #{policy_forward.1} parent=1 // pred_region
      _
    $region9: #{policy_forward.1} parent=1 // pred_fallthru
      _
    // Predicated region
    $region10: #{policy_forward.1} parent=1 // pred_check
      _
    $region11: #{policy_forward.1} parent=1 // pred_check_branch
      %17 = sbr.rel (0) target = $region13
    $region12: #{policy_forward.1} parent=1 // pred_region
      %19 = vsyncadd [#allocation3], 0
      %s20 = sshll.u32 %s2, 4
      %s21 = int_to_ptr.hbm [resolvable:$true] %s20
      %s22 = sshll.u32 [#allocation2], 4
      %s23 = int_to_ptr.vmem [resolvable:$true] %s22
      %28 = dma.hbm_to_vmem [thread:$0]  %s21, 8320, %s23, [#allocation3], 128, 128, 8
    $region13: #{policy_forward.1} parent=1 // pred_fallthru
      _
    // Predicated region
    $region14: #{policy_forward.1} parent=1 // pred_check
      _
    $region15: #{policy_forward.1} parent=1 // pred_check_branch
      %30 = sbr.rel (0) target = $region17
    $region16: #{policy_forward.1} parent=1 // pred_region
      %32 = dma.done [#allocation3], 8320
    $region17: #{policy_forward.1} parent=1 // pred_fallthru
      _
    %v33 = vld [vmem:[%s0] sm:$0x1]
    %v34 = vld [vmem:[#allocation2] sm:$0xff]
    %v35 = vld [vmem:[#allocation2 + $0x8] sm:$0xff]
    %v36 = vld [vmem:[#allocation2 + $0x10] sm:$0xff]
    %v37 = vld [vmem:[#allocation2 + $0x18] sm:$0xff]
    %v38 = vld [vmem:[#allocation2 + $0x20] sm:$0xff]
    %v39 = vld [vmem:[#allocation2 + $0x28] sm:$0xff]
    %v40 = vld [vmem:[#allocation2 + $0x30] sm:$0xff]
    %v41 = vld [vmem:[#allocation2 + $0x38] sm:$0xff]
    %v42 = vld [vmem:[#allocation2 + $0x40] sm:$0xff]
    %v43 = vld [vmem:[#allocation2 + $0x48] sm:$0xff]
    %v44 = vld [vmem:[#allocation2 + $0x50] sm:$0xff]
    %v45 = vld [vmem:[#allocation2 + $0x58] sm:$0xff]
    %v46 = vld [vmem:[#allocation2 + $0x60] sm:$0xff]
    %v47 = vld [vmem:[#allocation2 + $0x68] sm:$0xff]
    %v48 = vld [vmem:[#allocation2 + $0x70] sm:$0xff]
    %v49 = vld [vmem:[#allocation2 + $0x78] sm:$0xff]
    %v50 = vld [vmem:[#allocation2 + $0x200] sm:$0x1]
    %51 = vmatpush.msra.mxu0 %v49
    %52 = vmatpush.msra.mxu0 %v48
    %53 = vmatpush.msra.mxu0 %v47
    %54 = vmatpush.msra.mxu0 %v46
    %55 = vmatpush.msra.mxu0 %v45
    %56 = vmatpush.msra.mxu0 %v44
    %57 = vmatpush.msra.mxu0 %v43
    %58 = vmatpush.msra.mxu0 %v42
    %59 = vmatpush.msra.mxu0 %v41
    %60 = vmatpush.msra.mxu0 %v40
    %61 = vmatpush.msra.mxu0 %v39
    %62 = vmatpush.msra.mxu0 %v38
    %63 = vmatpush.msra.mxu0 %v37
    %64 = vmatpush.msra.mxu0 %v36
    %65 = vmatpush.msra.mxu0 %v35
    %66 = vmatpush.msra.mxu0 %v34
    %67 = vmatmul.f32.gmra.mxu0 %v33
    %v68 = vpop.f32.mrf.mxu0
    %v69 = vadd.f32 %v50, %v68
    %70 = vdwg.mxu0
    %v71 = vld [vmem:[%s1] sm:$0x1]
    %v72 = vld [vmem:[%s1 + $0x1] sm:$0x1]
    %v73 = vld [vmem:[%s1 + $0x2] sm:$0x1]
    %v74 = vld [vmem:[%s1 + $0x3] sm:$0x1]
    %v75 = vld [vmem:[#allocation2 + $0x80] sm:$0xff]
    %v76 = vld [vmem:[#allocation2 + $0x88] sm:$0xff]
    %v77 = vld [vmem:[#allocation2 + $0x90] sm:$0xff]
    %v78 = vld [vmem:[#allocation2 + $0x98] sm:$0xff]
    %vm79 = vcmask 261120
    %v81 = vsel %vm79, %v71, 0
    %83 = vmatpush.msra.mxu0 0.0
    %84 = vmatpush.msra.mxu0 0.0
    %85 = vmatpush.msra.mxu0 0.0
    %86 = vmatpush.msra.mxu0 0.0
    %87 = vmatpush.msra.mxu0 0.0
    %88 = vmatpush.msra.mxu0 0.0
    %89 = vmatpush.msra.mxu0 0.0
    %90 = vmatpush.msra.mxu0 0.0
    %91 = vmatpush.msra.mxu0 0.0
    %92 = vmatpush.msra.mxu0 0.0
    %93 = vmatpush.msra.mxu0 0.0
    %94 = vmatpush.msra.mxu0 0.0
    %95 = vmatpush.msra.mxu0 %v78
    %96 = vmatpush.msra.mxu0 %v77
    %97 = vmatpush.msra.mxu0 %v76
    %98 = vmatpush.msra.mxu0 %v75
    %99 = vmatmul.f32.gmra.mxu0 %v81
    %v100 = vpop.f32.mrf.mxu0
    %v101 = vadd.f32 0.0, %v100
    %102 = vdwg.mxu0
    %v103 = vadd.f32 %v69, %v101
    %v104 = vxor.u32 %v103, 2147483648
    %v105 = vmul.f32 %v104, 1.442695
    %v106 = vpow.pop %v105
    %v107 = vadd.f32 %v106, 1.0
    %v108 = vrcp.pop %v107
    %v109 = vmul.f32 %v107, %v108
    %v110 = vsub.f32 1.0, %v109
    %v111 = vmul.f32 %v108, %v110
    %v112 = vadd.f32 %v108, %v111
    %vm113 = vweird.f32 %v107
    %vm114 = vweird.f32 %v108
    %vm115 = vmor %vm113, %vm114
    %v116 = vsel %vm115, %v108, %v112
    %v117 = vand.u32 2147483647, %v107
    %vm118 = vcmp.eq.f32.partialorder %v117, 8.507059e+37
    %v119 = vand.u32 %v107, 2147483648
    %v120 = vor.u32 1.1754944e-38, %v119
    %v121 = vsel %vm118, %v120, %v116
    %v122 = vmul.f32 1.0, %v121
    %v123 = vtanh.pop %v103
    %125 = vrot.lane.b32.xlu0 %v73, 32
    %v126 = vpop.permute.xlu0 %125
    %v128 = vmul.f32 %v122, %v126
    %130 = vrot.lane.b32.xlu0 %v123, 64
    %v131 = vpop.permute.xlu0 %130
    %v133 = vmul.f32 %v122, %v131
    %135 = vrot.lane.b32.xlu0 %v133, 32
    %v136 = vpop.permute.xlu0 %135
    %v138 = vadd.f32 %v128, %v136
    %v139 = vtanh.pop %v138
    %141 = vrot.lane.b32.xlu0 %v139, 64
    %v142 = vpop.permute.xlu0 %141
    %v144 = vmul.f32 %v122, %v142
    %v145 = vld [vmem:[#allocation2 + $0xc0] sm:$0xff]
    %v146 = vld [vmem:[#allocation2 + $0xc8] sm:$0xff]
    %v147 = vld [vmem:[#allocation2 + $0xd0] sm:$0xff]
    %v148 = vld [vmem:[#allocation2 + $0xd8] sm:$0xff]
    %v149 = vld [vmem:[#allocation2 + $0xa0] sm:$0xff]
    %v150 = vld [vmem:[#allocation2 + $0xa8] sm:$0xff]
    %v151 = vld [vmem:[#allocation2 + $0xb0] sm:$0xff]
    %v152 = vld [vmem:[#allocation2 + $0xb8] sm:$0xff]
    %154 = vrot.lane.b32.xlu0 %v144, 32
    %v155 = vpop.permute.xlu0 %154
    %v156 = vsel %vm79, %v155, 0
    %158 = vmatpush.msra.mxu0 0.0
    %159 = vmatpush.msra.mxu0 0.0
    %160 = vmatpush.msra.mxu0 0.0
    %161 = vmatpush.msra.mxu0 0.0
    %162 = vmatpush.msra.mxu0 0.0
    %163 = vmatpush.msra.mxu0 0.0
    %164 = vmatpush.msra.mxu0 0.0
    %165 = vmatpush.msra.mxu0 0.0
    %166 = vmatpush.msra.mxu0 0.0
    %167 = vmatpush.msra.mxu0 0.0
    %168 = vmatpush.msra.mxu0 0.0
    %169 = vmatpush.msra.mxu0 0.0
    %170 = vmatpush.msra.mxu0 %v152
    %171 = vmatpush.msra.mxu0 %v151
    %172 = vmatpush.msra.mxu0 %v150
    %173 = vmatpush.msra.mxu0 %v149
    %174 = vmatmul.f32.gmra.mxu0 %v156
    %v175 = vpop.f32.mrf.mxu0
    %v176 = vadd.f32 0.0, %v175
    %177 = vdwg.mxu0
    %v179 = vsel %vm79, %v72, 0
    %181 = vmatpush.msra.mxu0 0.0
    %182 = vmatpush.msra.mxu0 0.0
    %183 = vmatpush.msra.mxu0 0.0
    %184 = vmatpush.msra.mxu0 0.0
    %185 = vmatpush.msra.mxu0 0.0
    %186 = vmatpush.msra.mxu0 0.0
    %187 = vmatpush.msra.mxu0 0.0
    %188 = vmatpush.msra.mxu0 0.0
    %189 = vmatpush.msra.mxu0 0.0
    %190 = vmatpush.msra.mxu0 0.0
    %191 = vmatpush.msra.mxu0 0.0
    %192 = vmatpush.msra.mxu0 0.0
    %193 = vmatpush.msra.mxu0 %v148
    %194 = vmatpush.msra.mxu0 %v147
    %195 = vmatpush.msra.mxu0 %v146
    %196 = vmatpush.msra.mxu0 %v145
    %197 = vmatmul.f32.gmra.mxu0 %v179
    %v198 = vpop.f32.mrf.mxu0
    %v199 = vadd.f32 %v176, %v198
    %200 = vdwg.mxu0
    %v201 = vld [vmem:[#allocation2 + $0x201] sm:$0x1]
    %v202 = vadd.f32 %v199, %v201
    %v203 = vxor.u32 %v202, 2147483648
    %v204 = vmul.f32 %v203, 1.442695
    %v205 = vpow.pop %v204
    %v206 = vadd.f32 %v205, 1.0
    %v207 = vrcp.pop %v206
    %v208 = vmul.f32 %v206, %v207
    %v209 = vsub.f32 1.0, %v208
    %v210 = vmul.f32 %v207, %v209
    %v211 = vadd.f32 %v207, %v210
    %vm212 = vweird.f32 %v206
    %vm213 = vweird.f32 %v207
    %vm214 = vmor %vm212, %vm213
    %v215 = vsel %vm214, %v207, %v211
    %v216 = vand.u32 2147483647, %v206
    %vm217 = vcmp.eq.f32.partialorder %v216, 8.507059e+37
    %v218 = vand.u32 %v206, 2147483648
    %v219 = vor.u32 1.1754944e-38, %v218
    %v220 = vsel %vm217, %v219, %v215
    %v221 = vmul.f32 1.0, %v220
    %v222 = vtanh.pop %v202
    %224 = vrot.lane.b32.xlu0 %v74, 32
    %v225 = vpop.permute.xlu0 %224
    %v227 = vmul.f32 %v221, %v225
    %229 = vrot.lane.b32.xlu0 %v222, 64
    %v230 = vpop.permute.xlu0 %229
    %v232 = vmul.f32 %v221, %v230
    %234 = vrot.lane.b32.xlu0 %v232, 32
    %v235 = vpop.permute.xlu0 %234
    %v237 = vadd.f32 %v227, %v235
    %v238 = vtanh.pop %v237
    %240 = vrot.lane.b32.xlu0 %v238, 64
    %v241 = vpop.permute.xlu0 %240
    %v243 = vmul.f32 %v221, %v241
    %v244 = vld [vmem:[#allocation2 + $0xe0] sm:$0xff]
    %v245 = vld [vmem:[#allocation2 + $0xe8] sm:$0xff]
    %v246 = vld [vmem:[#allocation2 + $0xf0] sm:$0xff]
    %v247 = vld [vmem:[#allocation2 + $0xf8] sm:$0xff]
    %v248 = vld [vmem:[#allocation2 + $0x202] sm:$0x1]
    %250 = vrot.lane.b32.xlu0 %v243, 32
    %v251 = vpop.permute.xlu0 %250
    %v252 = vsel %vm79, %v251, 0
    %254 = vmatpush.msra.mxu0 0.0
    %255 = vmatpush.msra.mxu0 0.0
    %256 = vmatpush.msra.mxu0 0.0
    %257 = vmatpush.msra.mxu0 0.0
    %258 = vmatpush.msra.mxu0 0.0
    %259 = vmatpush.msra.mxu0 0.0
    %260 = vmatpush.msra.mxu0 0.0
    %261 = vmatpush.msra.mxu0 0.0
    %262 = vmatpush.msra.mxu0 0.0
    %263 = vmatpush.msra.mxu0 0.0
    %264 = vmatpush.msra.mxu0 0.0
    %265 = vmatpush.msra.mxu0 0.0
    %266 = vmatpush.msra.mxu0 %v247
    %267 = vmatpush.msra.mxu0 %v246
    %268 = vmatpush.msra.mxu0 %v245
    %269 = vmatpush.msra.mxu0 %v244
    %270 = vmatmul.f32.gmra.mxu0 %v252
    %v271 = vpop.f32.mrf.mxu0
    %v272 = vadd.f32 %v248, %v271
    %273 = vdwg.mxu0
    %vm274 = vcmp.gt.f32.partialorder %v272, 0.0
    %v275 = vmin.f32 %v272, 0.0
    %v276 = vmul.f32 %v275, 1.442695
    %v277 = vpow.pop %v276
    %v278 = vsub.f32 %v277, 1.0
    %v279 = vsel %vm274, %v272, %v278
    %v280 = vld [vmem:[#allocation2 + $0x100] sm:$0xff]
    %v281 = vld [vmem:[#allocation2 + $0x108] sm:$0xff]
    %v282 = vld [vmem:[#allocation2 + $0x110] sm:$0xff]
    %v283 = vld [vmem:[#allocation2 + $0x118] sm:$0xff]
    %v284 = vld [vmem:[#allocation2 + $0x120] sm:$0xff]
    %v285 = vld [vmem:[#allocation2 + $0x128] sm:$0xff]
    %v286 = vld [vmem:[#allocation2 + $0x130] sm:$0xff]
    %v287 = vld [vmem:[#allocation2 + $0x138] sm:$0xff]
    %v288 = vld [vmem:[#allocation2 + $0x140] sm:$0xff]
    %v289 = vld [vmem:[#allocation2 + $0x148] sm:$0xff]
    %v290 = vld [vmem:[#allocation2 + $0x150] sm:$0xff]
    %v291 = vld [vmem:[#allocation2 + $0x158] sm:$0xff]
    %v292 = vld [vmem:[#allocation2 + $0x160] sm:$0xff]
    %v293 = vld [vmem:[#allocation2 + $0x168] sm:$0xff]
    %v294 = vld [vmem:[#allocation2 + $0x170] sm:$0xff]
    %v295 = vld [vmem:[#allocation2 + $0x178] sm:$0xff]
    %v296 = vld [vmem:[#allocation2 + $0x203] sm:$0x1]
    %297 = vmatpush.msra.mxu0 %v295
    %298 = vmatpush.msra.mxu0 %v294
    %299 = vmatpush.msra.mxu0 %v293
    %300 = vmatpush.msra.mxu0 %v292
    %301 = vmatpush.msra.mxu0 %v291
    %302 = vmatpush.msra.mxu0 %v290
    %303 = vmatpush.msra.mxu0 %v289
    %304 = vmatpush.msra.mxu0 %v288
    %305 = vmatpush.msra.mxu0 %v287
    %306 = vmatpush.msra.mxu0 %v286
    %307 = vmatpush.msra.mxu0 %v285
    %308 = vmatpush.msra.mxu0 %v284
    %309 = vmatpush.msra.mxu0 %v283
    %310 = vmatpush.msra.mxu0 %v282
    %311 = vmatpush.msra.mxu0 %v281
    %312 = vmatpush.msra.mxu0 %v280
    %313 = vmatmul.f32.gmra.mxu0 %v279
    %v314 = vpop.f32.mrf.mxu0
    %v315 = vadd.f32 %v296, %v314
    %316 = vdwg.mxu0
    %vm317 = vcmp.gt.f32.partialorder %v315, 0.0
    %v318 = vmin.f32 %v315, 0.0
    %v319 = vmul.f32 %v318, 1.442695
    %v320 = vpow.pop %v319
    %v321 = vsub.f32 %v320, 1.0
    %v322 = vsel %vm317, %v315, %v321
    %v323 = vld [vmem:[#allocation2 + $0x180] sm:$0xff]
    %v324 = vld [vmem:[#allocation2 + $0x188] sm:$0xff]
    %v325 = vld [vmem:[#allocation2 + $0x190] sm:$0xff]
    %v326 = vld [vmem:[#allocation2 + $0x198] sm:$0xff]
    %v327 = vld [vmem:[#allocation2 + $0x1a0] sm:$0xff]
    %v328 = vld [vmem:[#allocation2 + $0x1a8] sm:$0xff]
    %v329 = vld [vmem:[#allocation2 + $0x1b0] sm:$0xff]
    %v330 = vld [vmem:[#allocation2 + $0x1b8] sm:$0xff]
    %v331 = vld [vmem:[#allocation2 + $0x1c0] sm:$0xff]
    %v332 = vld [vmem:[#allocation2 + $0x1c8] sm:$0xff]
    %v333 = vld [vmem:[#allocation2 + $0x1d0] sm:$0xff]
    %v334 = vld [vmem:[#allocation2 + $0x1d8] sm:$0xff]
    %v335 = vld [vmem:[#allocation2 + $0x1e0] sm:$0xff]
    %v336 = vld [vmem:[#allocation2 + $0x1e8] sm:$0xff]
    %v337 = vld [vmem:[#allocation2 + $0x1f0] sm:$0xff]
    %v338 = vld [vmem:[#allocation2 + $0x1f8] sm:$0xff]
    %v339 = vld [vmem:[#allocation2 + $0x204] sm:$0x1]
    %340 = vmatpush.msra.mxu0 %v338
    %341 = vmatpush.msra.mxu0 %v337
    %342 = vmatpush.msra.mxu0 %v336
    %343 = vmatpush.msra.mxu0 %v335
    %344 = vmatpush.msra.mxu0 %v334
    %345 = vmatpush.msra.mxu0 %v333
    %346 = vmatpush.msra.mxu0 %v332
    %347 = vmatpush.msra.mxu0 %v331
    %348 = vmatpush.msra.mxu0 %v330
    %349 = vmatpush.msra.mxu0 %v329
    %350 = vmatpush.msra.mxu0 %v328
    %351 = vmatpush.msra.mxu0 %v327
    %352 = vmatpush.msra.mxu0 %v326
    %353 = vmatpush.msra.mxu0 %v325
    %354 = vmatpush.msra.mxu0 %v324
    %355 = vmatpush.msra.mxu0 %v323
    %356 = vmatmul.f32.gmra.mxu0 %v322
    %v357 = vpop.f32.mrf.mxu0
    %v358 = vadd.f32 %v339, %v357
    %359 = vdwg.mxu0
    %360 = vst [vmem:[#allocation5] sm:$0x1] %v358
    %v361 = vld [vmem:[%s1] sm:$0xff]
    %362 = vst [vmem:[%s4] sm:$0xff] %v361
    %vm364 = vcmask 253952
    %365 = vst.msk [vmem:[%s4] sm:$0x1] %vm364, %v155
    %367 = vst.msk [vmem:[%s4 + $0x1] sm:$0x1] %vm364, %v251
    %369 = vrot.lane.b32.xlu0 %v138, 96
    %v370 = vpop.permute.xlu0 %369
    %372 = vst.msk [vmem:[%s4 + $0x2] sm:$0x1] %vm364, %v370
    %374 = vrot.lane.b32.xlu0 %v237, 96
    %v375 = vpop.permute.xlu0 %374
    %377 = vst.msk [vmem:[%s4 + $0x3] sm:$0x1] %vm364, %v375
    // Predicated region
    $region18: #{policy_forward.1} parent=1 // pred_check
      _
    $region19: #{policy_forward.1} parent=1 // pred_check_branch
      %379 = sbr.rel (0) target = $region21
    $region20: #{policy_forward.1} parent=1 // pred_region
      %381 = vsyncadd [#allocation4], 0
      %s383 = sshll.u32 [#allocation5], 4
      %s384 = int_to_ptr.vmem [resolvable:$true] %s383
      %s385 = sshll.u32 %s3, 4
      %s386 = int_to_ptr.hbm [resolvable:$true] %s385
      %388 = dma.vmem_to_hbm [thread:$0]  %s384, 16, %s386, [#allocation4]
    $region21: #{policy_forward.1} parent=1 // pred_fallthru
      _
    // Predicated region
    $region22: #{policy_forward.1} parent=1 // pred_check
      _
    $region23: #{policy_forward.1} parent=1 // pred_check_branch
      %390 = sbr.rel (0) target = $region25
    $region24: #{policy_forward.1} parent=1 // pred_region
      _
    $region25: #{policy_forward.1} parent=1 // pred_fallthru
      _
    // Predicated region
    $region26: #{policy_forward.1} parent=1 // pred_check
      _
    $region27: #{policy_forward.1} parent=1 // pred_check_branch
      %392 = sbr.rel (0) target = $region29
    $region28: #{policy_forward.1} parent=1 // pred_region
      %394 = dma.done [#allocation4], 16
    $region29: #{policy_forward.1} parent=1 // pred_fallthru
      _
    // Predicated region
    $region30: #{policy_forward.1} parent=1 // pred_check
      _
    $region31: #{policy_forward.1} parent=1 // pred_check_branch
      %396 = sbr.rel (0) target = $region33
    $region32: #{policy_forward.1} parent=1 // pred_region
      _
    $region33: #{policy_forward.1} parent=1 // pred_fallthru
      _
    %397 = vsyncpa [#allocation3], 1
    %398 = vsyncpa [#allocation4], 1

</llo_original>
